<compile_context>
chip_gen: v6e
topology: v6e:2x2x1
jax: 0.10.0
libtpu: 0.0.40
codegen_flags: <defaults>
</compile_context>

<pallas_src>
import math
from functools import partial

import jax
import jax.numpy as jnp
from jax import lax
from jax.experimental import pallas as pl
from jax.experimental.pallas import tpu as pltpu

DIM = 32               # entity / relation embedding dim (rel_dim == dim for transe)
NUM_ENTITIES = 40
NUM_RELATIONS = 11
REGULARIZER = 0.01
EPS = 1e-12            # torch.nn.functional.normalize default eps


def _round_up(x, m):
    return (x + m - 1) // m * m


def _make_loss_kernel(B, N, D, num_entities, num_relations):
    """Build the fused TransE margin-loss kernel for fixed (B, N, D, E, R)."""
    E, R = num_entities, num_relations
    BN = B * N
    TWO_B = 2 * B
    OP = _round_up(TWO_B + R, 8)        # gathered-operand rows (sublane padded)
    SEL = TWO_B + BN                    # selection rows: B pos + BN neg + B reg
    SEG = _round_up(SEL, 8)             # padded segment length inside idx pack
    OFF_P, OFF_M, OFF_R = OP, OP + SEG, OP + 2 * SEG
    inv_bn = 1.0 / BN
    reg_scale = REGULARIZER / (3.0 * B * D)

    def kernel(idx_ref, tab_ref, out_ref):
        # idx_ref : (OP + 3*SEG, 1) int32 VMEM, packed as
        #           [gather row ids | +1 column | -1 column | relation column]
        # tab_ref : (E + R, D) f32 VMEM — [entity table ; relation table]
        # out_ref : (1, 1) f32 SMEM — scalar loss
        f32, bf16 = jnp.float32, jnp.bfloat16

        def onehot(eq):                  # compare/select stays f32 on the VPU
            return jnp.where(eq, 1.0, 0.0)

        # ---- matmul 1: fused row gather of [2B entities ; R relations] ------
        # The one-hot rows are exact in bf16; table entries round to bf16
        # (~1e-3 relative), inside the stated tolerance.  f32 accumulation.
        gids = idx_ref[pl.ds(0, OP), :]                                     # (OP, 1)
        gcol = lax.broadcasted_iota(jnp.int32, (OP, E + R), 1)
        gathered = jnp.dot(onehot(gcol == gids).astype(bf16),
                           tab_ref[...].astype(bf16),
                           preferred_element_type=f32)                      # (OP, D)

        # ---- L2-normalize ONLY the 2B entity rows (TransE normalize_embs) ---
        # x * rsqrt(max(||x||^2, eps^2))  ==  x / max(||x||, eps) up to rounding.
        sumsq = jnp.sum(gathered * gathered, axis=-1, keepdims=True)        # (OP, 1)
        is_ent = lax.broadcasted_iota(jnp.int32, (OP, 1), 0) < TWO_B
        scale = jnp.where(is_ent, lax.rsqrt(jnp.maximum(sumsq, EPS * EPS)), 1.0)
        operand = gathered * scale                                          # (OP, D)

        # ---- matmul 2: ONE combined +/-1 selection emits every h-t+r row ----
        # rows: [B positives | B*N negatives (n-major) | B relation rows (reg)]
        pc = idx_ref[pl.ds(OFF_P, SEL), :]                                  # +1 col id
        mc = idx_ref[pl.ds(OFF_M, SEL), :]                                  # -1 col id
        rc = idx_ref[pl.ds(OFF_R, SEL), :]                                  # +1 rel col id
        scol = lax.broadcasted_iota(jnp.int32, (SEL, OP), 1)
        sel = onehot(scol == pc) - onehot(scol == mc) + onehot(scol == rc)  # f32 {-1,0,1}
        stacked = jnp.dot(sel.astype(bf16), operand.astype(bf16),
                          preferred_element_type=f32)                       # (SEL, D)

        # ---- one stacked L1 lane-reduction over the (pos ; neg) rows --------
        l1 = jnp.sum(jnp.abs(stacked[:B + BN, :]), axis=-1, keepdims=True)  # (B+BN, 1)
        pos_l1 = l1[:B, :]                                                  # (B, 1)

        # score = -L1  =>  1 - pos + neg = 1 + L1_pos - L1_neg.  Negatives are
        # ordered n-major, so each of the N blocks is a sublane-aligned (B, 1)
        # column already lined up with pos_l1.  Static unroll (N is tiny).
        hinge = jnp.zeros((B, 1), dtype=f32)
        for n in range(N):
            neg_l1 = l1[B + n * B:B + (n + 1) * B, :]
            hinge = hinge + jnp.maximum(1.0 + pos_l1 - neg_l1, 0.0)
        model_loss = jnp.sum(hinge) * inv_bn

        # ---- L2 reg on normalized heads/tails + the B gathered r rows -------
        slab = operand[:TWO_B, :]                                           # (2B, D)
        r_rows = stacked[B + BN:, :]                                        # (B, D)
        reg_sum = jnp.sum(slab * slab) + jnp.sum(r_rows * r_rows)

        out_ref[0, 0] = model_loss + reg_sum * reg_scale

    return kernel


@partial(jax.jit, static_argnames=("num_entities",))
def transductive_link_prediction_loss(fused_table, pos_pairs, rels, neg_idx,
                                      *, num_entities):
    """Fused forward: tiny int32 index packing (XLA glue) + ONE Pallas kernel."""
    E = num_entities
    R = fused_table.shape[0] - E
    D = fused_table.shape[1]
    B = pos_pairs.shape[0]
    N = neg_idx.shape[1]
    BN = B * N
    TWO_B = 2 * B
    OP = _round_up(TWO_B + R, 8)
    SEL = TWO_B + BN
    SEG = _round_up(SEL, 8)
    i32 = jnp.int32

    # ---- index-only preprocessing (<200 int32 values, fused by XLA) ---------
    rels_flat = rels.reshape(B).astype(i32)
    # gather ids: 2B entity rows (h0,t0,h1,t1,...) then the R relation rows of
    # the fused table; pad to OP with 0 (padded operand rows are never selected).
    gather_ids = jnp.concatenate([
        pos_pairs.reshape(TWO_B).astype(i32),
        jnp.arange(E, E + R, dtype=i32),
        jnp.zeros((OP - TWO_B - R,), dtype=i32),
    ])
    # Selection rows: [B positives | B*N negatives in n-major order | B reg rows].
    negh = neg_idx[:, :, 0].astype(i32).T.reshape(BN)   # row n*B+b -> neg_idx[b,n,0]
    negt = neg_idx[:, :, 1].astype(i32).T.reshape(BN)
    rel_rep = jnp.tile(rels_flat, N)                    # row n*B+b -> rels[b]
    no_ent = jnp.full((B,), -1, dtype=i32)              # reg rows: no slab entries
    pad = jnp.full((SEG - SEL,), -1, dtype=i32)
    pcol = jnp.concatenate([2 * jnp.arange(B, dtype=i32), negh, no_ent, pad])
    mcol = jnp.concatenate([2 * jnp.arange(B, dtype=i32) + 1, negt, no_ent, pad])
    rcol = jnp.concatenate([TWO_B + rels_flat, TWO_B + rel_rep,
                            TWO_B + rels_flat, pad])
    idx_packed = jnp.concatenate([gather_ids, pcol, mcol, rcol])[:, None]

    kernel = _make_loss_kernel(B, N, D, E, R)
    vmem = pl.BlockSpec(memory_space=pltpu.MemorySpace.VMEM)
    # Gridless call: total resident data is a few KiB (2 DMA descriptors in,
    # one SMEM scalar out).  See the scaling plan in the header for large B/E.
    out = pl.pallas_call(
        kernel,
        out_shape=jax.ShapeDtypeStruct((1, 1), jnp.float32),
        in_specs=[vmem, vmem],
        out_specs=pl.BlockSpec(memory_space=pltpu.MemorySpace.SMEM),
    )(idx_packed, fused_table)
    return out[0, 0]


def _reference_loss(ent_table, rel_table, pos_pairs, rels, neg_idx):
    """Plain-JAX mirror of the PyTorch forward (sanity check only)."""
    B = pos_pairs.shape[0]
    embs = ent_table[pos_pairs]                                    # (B, 2, D)
    norm = jnp.sqrt(jnp.sum(embs * embs, axis=-1, keepdims=True))
    embs = embs / jnp.maximum(norm, EPS)                           # F.normalize
    heads, tails = embs[:, 0, :], embs[:, 1, :]
    r = rel_table[rels[:, 0]]                                      # (B, D)
    pos_scores = -jnp.sum(jnp.abs(heads + r - tails), axis=-1)     # (B,)
    neg = embs.reshape(2 * B, -1)[neg_idx]                         # (B, N, 2, D)
    nh, nt = neg[:, :, 0, :], neg[:, :, 1, :]
    neg_scores = -jnp.sum(jnp.abs(nh + r[:, None, :] - nt), axis=-1)   # (B, N)
    model_loss = jnp.mean(jnp.maximum(1.0 - pos_scores[:, None] + neg_scores, 0.0))
    reg = (jnp.mean(heads ** 2) + jnp.mean(tails ** 2) + jnp.mean(r ** 2)) / 3.0
    return model_loss + REGULARIZER * reg


def xavier_uniform(key, shape):
    """nn.init.xavier_uniform_ for a 2-D weight (fan_out, fan_in) = shape."""
    fan_out, fan_in = shape
    a = math.sqrt(6.0 / (fan_in + fan_out))
    return jax.random.uniform(key, shape, jnp.float32, minval=-a, maxval=a)


if __name__ == "__main__":
    key = jax.random.PRNGKey(0)
    k_ent, k_rel, k_pairs, k_rels, k_neg = jax.random.split(key, 5)

    B, N = 8, 4  # batch size, negatives per positive

    # Deterministic parameter init (module __init__ shapes)
    ent_table = xavier_uniform(k_ent, (NUM_ENTITIES, DIM))    # nn.Embedding(num_entities, dim)
    rel_table = xavier_uniform(k_rel, (NUM_RELATIONS, DIM))   # nn.Embedding(num_relations, rel_dim)

    # "Module init": fuse the two step-constant embedding tables ONCE so the
    # kernel takes a single table input (2 DMA descriptors instead of 3).
    fused_table = jnp.concatenate([ent_table, rel_table], axis=0)

    # Example inputs
    pos_pairs = jax.random.randint(k_pairs, (B, 2), 0, NUM_ENTITIES, dtype=jnp.int32)
    rels = jax.random.randint(k_rels, (B, 1), 0, NUM_RELATIONS, dtype=jnp.int32)
    neg_idx = jax.random.randint(k_neg, (B, N, 2), 0, 2 * B, dtype=jnp.int32)

    loss = transductive_link_prediction_loss(
        fused_table, pos_pairs, rels, neg_idx, num_entities=NUM_ENTITIES)
    jax.block_until_ready(loss)

    # Loose-tolerance sanity check against the plain-JAX reference
    # (bf16 matmul operands introduce ~1e-3 relative rounding, far below 5e-2).
    ref = _reference_loss(ent_table, rel_table, pos_pairs, rels, neg_idx)
    err = abs(float(loss) - float(ref))
    assert err < 5e-2 * (1.0 + abs(float(ref))), (float(loss), float(ref))

    print("KERNEL_OK")
</pallas_src>

<mosaic_0001>
module attributes {stable_mosaic.version = 11 : i64} {
  func.func @kernel(%arg0: memref<176x1xi32, #tpu.memory_space<vmem>>, %arg1: memref<51x32xf32, #tpu.memory_space<vmem>>, %arg2: memref<1x1xf32, #tpu.memory_space<smem>>) attributes {dimension_semantics = [], scalar_prefetch = 0 : i64, scratch_operands = 0 : i64, tpu.core_type = #tpu.core_type<tc>} {
    %c0 = arith.constant 0 : index
    %c0_0 = arith.constant 0 : index
    %0 = vector.load %arg0[%c0, %c0_0] : memref<176x1xi32, #tpu.memory_space<vmem>>, vector<32x1xi32>
    %1 = tpu.iota {dimensions = array<i32: 1>} : vector<32x51xi32>
    %2 = vector.broadcast %0 : vector<32x1xi32> to vector<32x51xi32>
    %3 = arith.cmpi eq, %1, %2 : vector<32x51xi32>
    %cst = arith.constant 1.000000e+00 : f32
    %cst_1 = arith.constant 0.000000e+00 : f32
    %4 = vector.broadcast %cst : f32 to vector<32x51xf32>
    %5 = vector.broadcast %cst_1 : f32 to vector<32x51xf32>
    %6 = arith.select %3, %4, %5 : vector<32x51xi1>, vector<32x51xf32>
    %7 = arith.truncf %6 : vector<32x51xf32> to vector<32x51xbf16>
    %c0_2 = arith.constant 0 : index
    %c0_3 = arith.constant 0 : index
    %8 = vector.load %arg1[%c0_2, %c0_3] : memref<51x32xf32, #tpu.memory_space<vmem>>, vector<51x32xf32>
    %9 = arith.truncf %8 : vector<51x32xf32> to vector<51x32xbf16>
    %cst_4 = arith.constant dense<0.000000e+00> : vector<32x32xf32>
    %10 = tpu.matmul %7, %9, %cst_4 {dimension_numbers = #tpu.dot_dimension_numbers<[1], [0], [0], [1], [0, 0, 1, 1], [], []>} : vector<32x51xbf16>, vector<51x32xbf16>, vector<32x32xf32> -> vector<32x32xf32>
    %11 = arith.mulf %10, %10 : vector<32x32xf32>
    %cst_5 = arith.constant dense<0.000000e+00> : vector<32xf32>
    %12 = vector.multi_reduction <add>, %11, %cst_5 [1] : vector<32x32xf32> to vector<32xf32>
    %13 = vector.shape_cast %12 : vector<32xf32> to vector<32x1xf32>
    %14 = tpu.iota {dimensions = array<i32: 0>} : vector<32x1xi32>
    %c16_i32 = arith.constant 16 : i32
    %15 = vector.broadcast %c16_i32 : i32 to vector<32x1xi32>
    %16 = arith.cmpi slt, %14, %15 : vector<32x1xi32>
    %cst_6 = arith.constant 1.000000e-24 : f32
    %17 = vector.broadcast %cst_6 : f32 to vector<32x1xf32>
    %18 = arith.maximumf %13, %17 : vector<32x1xf32>
    %19 = math.rsqrt %18 : vector<32x1xf32>
    %cst_7 = arith.constant 1.000000e+00 : f32
    %20 = vector.broadcast %cst_7 : f32 to vector<32x1xf32>
    %21 = arith.select %16, %19, %20 : vector<32x1xi1>, vector<32x1xf32>
    %22 = vector.broadcast %21 : vector<32x1xf32> to vector<32x32xf32>
    %23 = arith.mulf %10, %22 : vector<32x32xf32>
    %c32 = arith.constant 32 : index
    %c0_8 = arith.constant 0 : index
    %24 = vector.load %arg0[%c32, %c0_8] : memref<176x1xi32, #tpu.memory_space<vmem>>, vector<48x1xi32>
    %c80 = arith.constant 80 : index
    %c0_9 = arith.constant 0 : index
    %25 = vector.load %arg0[%c80, %c0_9] : memref<176x1xi32, #tpu.memory_space<vmem>>, vector<48x1xi32>
    %c128 = arith.constant 128 : index
    %c0_10 = arith.constant 0 : index
    %26 = vector.load %arg0[%c128, %c0_10] : memref<176x1xi32, #tpu.memory_space<vmem>>, vector<48x1xi32>
    %27 = tpu.iota {dimensions = array<i32: 1>} : vector<48x32xi32>
    %28 = vector.broadcast %24 : vector<48x1xi32> to vector<48x32xi32>
    %29 = arith.cmpi eq, %27, %28 : vector<48x32xi32>
    %cst_11 = arith.constant 1.000000e+00 : f32
    %cst_12 = arith.constant 0.000000e+00 : f32
    %30 = vector.broadcast %cst_11 : f32 to vector<48x32xf32>
    %31 = vector.broadcast %cst_12 : f32 to vector<48x32xf32>
    %32 = arith.select %29, %30, %31 : vector<48x32xi1>, vector<48x32xf32>
    %33 = vector.broadcast %25 : vector<48x1xi32> to vector<48x32xi32>
    %34 = arith.cmpi eq, %27, %33 : vector<48x32xi32>
    %cst_13 = arith.constant 1.000000e+00 : f32
    %cst_14 = arith.constant 0.000000e+00 : f32
    %35 = vector.broadcast %cst_13 : f32 to vector<48x32xf32>
    %36 = vector.broadcast %cst_14 : f32 to vector<48x32xf32>
    %37 = arith.select %34, %35, %36 : vector<48x32xi1>, vector<48x32xf32>
    %38 = arith.subf %32, %37 : vector<48x32xf32>
    %39 = vector.broadcast %26 : vector<48x1xi32> to vector<48x32xi32>
    %40 = arith.cmpi eq, %27, %39 : vector<48x32xi32>
    %cst_15 = arith.constant 1.000000e+00 : f32
    %cst_16 = arith.constant 0.000000e+00 : f32
    %41 = vector.broadcast %cst_15 : f32 to vector<48x32xf32>
    %42 = vector.broadcast %cst_16 : f32 to vector<48x32xf32>
    %43 = arith.select %40, %41, %42 : vector<48x32xi1>, vector<48x32xf32>
    %44 = arith.addf %38, %43 : vector<48x32xf32>
    %45 = arith.truncf %44 : vector<48x32xf32> to vector<48x32xbf16>
    %46 = arith.truncf %23 : vector<32x32xf32> to vector<32x32xbf16>
    %cst_17 = arith.constant dense<0.000000e+00> : vector<48x32xf32>
    %47 = tpu.matmul %45, %46, %cst_17 {dimension_numbers = #tpu.dot_dimension_numbers<[1], [0], [0], [1], [0, 0, 1, 1], [], []>} : vector<48x32xbf16>, vector<32x32xbf16>, vector<48x32xf32> -> vector<48x32xf32>
    %48 = vector.extract_strided_slice %47 {offsets = [0, 0], sizes = [40, 32], strides = [1, 1]} : vector<48x32xf32> to vector<40x32xf32>
    %49 = math.absf %48 : vector<40x32xf32>
    %cst_18 = arith.constant dense<0.000000e+00> : vector<40xf32>
    %50 = vector.multi_reduction <add>, %49, %cst_18 [1] : vector<40x32xf32> to vector<40xf32>
    %51 = vector.shape_cast %50 : vector<40xf32> to vector<40x1xf32>
    %52 = vector.extract_strided_slice %51 {offsets = [0, 0], sizes = [8, 1], strides = [1, 1]} : vector<40x1xf32> to vector<8x1xf32>
    %cst_19 = arith.constant 0.000000e+00 : f32
    %53 = vector.broadcast %cst_19 : f32 to vector<8x1xf32>
    %54 = vector.extract_strided_slice %51 {offsets = [8, 0], sizes = [8, 1], strides = [1, 1]} : vector<40x1xf32> to vector<8x1xf32>
    %cst_20 = arith.constant 1.000000e+00 : f32
    %55 = vector.broadcast %cst_20 : f32 to vector<8x1xf32>
    %56 = arith.addf %55, %52 : vector<8x1xf32>
    %57 = arith.subf %56, %54 : vector<8x1xf32>
    %cst_21 = arith.constant 0.000000e+00 : f32
    %58 = vector.broadcast %cst_21 : f32 to vector<8x1xf32>
    %59 = arith.maximumf %57, %58 : vector<8x1xf32>
    %60 = arith.addf %53, %59 : vector<8x1xf32>
    %61 = vector.extract_strided_slice %51 {offsets = [16, 0], sizes = [8, 1], strides = [1, 1]} : vector<40x1xf32> to vector<8x1xf32>
    %cst_22 = arith.constant 1.000000e+00 : f32
    %62 = vector.broadcast %cst_22 : f32 to vector<8x1xf32>
    %63 = arith.addf %62, %52 : vector<8x1xf32>
    %64 = arith.subf %63, %61 : vector<8x1xf32>
    %cst_23 = arith.constant 0.000000e+00 : f32
    %65 = vector.broadcast %cst_23 : f32 to vector<8x1xf32>
    %66 = arith.maximumf %64, %65 : vector<8x1xf32>
    %67 = arith.addf %60, %66 : vector<8x1xf32>
    %68 = vector.extract_strided_slice %51 {offsets = [24, 0], sizes = [8, 1], strides = [1, 1]} : vector<40x1xf32> to vector<8x1xf32>
    %cst_24 = arith.constant 1.000000e+00 : f32
    %69 = vector.broadcast %cst_24 : f32 to vector<8x1xf32>
    %70 = arith.addf %69, %52 : vector<8x1xf32>
    %71 = arith.subf %70, %68 : vector<8x1xf32>
    %cst_25 = arith.constant 0.000000e+00 : f32
    %72 = vector.broadcast %cst_25 : f32 to vector<8x1xf32>
    %73 = arith.maximumf %71, %72 : vector<8x1xf32>
    %74 = arith.addf %67, %73 : vector<8x1xf32>
    %75 = vector.extract_strided_slice %51 {offsets = [32, 0], sizes = [8, 1], strides = [1, 1]} : vector<40x1xf32> to vector<8x1xf32>
    %cst_26 = arith.constant 1.000000e+00 : f32
    %76 = vector.broadcast %cst_26 : f32 to vector<8x1xf32>
    %77 = arith.addf %76, %52 : vector<8x1xf32>
    %78 = arith.subf %77, %75 : vector<8x1xf32>
    %cst_27 = arith.constant 0.000000e+00 : f32
    %79 = vector.broadcast %cst_27 : f32 to vector<8x1xf32>
    %80 = arith.maximumf %78, %79 : vector<8x1xf32>
    %81 = arith.addf %74, %80 : vector<8x1xf32>
    %82 = vector.shape_cast %81 : vector<8x1xf32> to vector<1x8x1xf32>
    %cst_28 = arith.constant dense<0.000000e+00> : vector<1xf32>
    %83 = vector.multi_reduction <add>, %82, %cst_28 [1, 2] : vector<1x8x1xf32> to vector<1xf32>
    %84 = vector.shape_cast %83 : vector<1xf32> to vector<1x1x1xf32>
    %85 = vector.extract %84[0, 0, 0] : f32 from vector<1x1x1xf32>
    %cst_29 = arith.constant 3.125000e-02 : f32
    %86 = arith.mulf %85, %cst_29 : f32
    %87 = vector.extract_strided_slice %23 {offsets = [0, 0], sizes = [16, 32], strides = [1, 1]} : vector<32x32xf32> to vector<16x32xf32>
    %88 = vector.extract_strided_slice %47 {offsets = [40, 0], sizes = [8, 32], strides = [1, 1]} : vector<48x32xf32> to vector<8x32xf32>
    %89 = arith.mulf %87, %87 : vector<16x32xf32>
    %90 = vector.shape_cast %89 : vector<16x32xf32> to vector<1x16x32xf32>
    %cst_30 = arith.constant dense<0.000000e+00> : vector<1xf32>
    %91 = vector.multi_reduction <add>, %90, %cst_30 [1, 2] : vector<1x16x32xf32> to vector<1xf32>
    %92 = vector.shape_cast %91 : vector<1xf32> to vector<1x1x1xf32>
    %93 = vector.extract %92[0, 0, 0] : f32 from vector<1x1x1xf32>
    %94 = arith.mulf %88, %88 : vector<8x32xf32>
    %95 = vector.shape_cast %94 : vector<8x32xf32> to vector<1x8x32xf32>
    %cst_31 = arith.constant dense<0.000000e+00> : vector<1xf32>
    %96 = vector.multi_reduction <add>, %95, %cst_31 [1, 2] : vector<1x8x32xf32> to vector<1xf32>
    %97 = vector.shape_cast %96 : vector<1xf32> to vector<1x1x1xf32>
    %98 = vector.extract %97[0, 0, 0] : f32 from vector<1x1x1xf32>
    %99 = arith.addf %93, %98 : f32
    %cst_32 = arith.constant 1.30208336E-5 : f32
    %100 = arith.mulf %99, %cst_32 : f32
    %101 = arith.addf %86, %100 : f32
    %c0_33 = arith.constant 0 : index
    %c0_34 = arith.constant 0 : index
    %102 = memref.load %arg2[%c0_33, %c0_34] : memref<1x1xf32, #tpu.memory_space<smem>>
    memref.store %101, %arg2[%c0_33, %c0_34] : memref<1x1xf32, #tpu.memory_space<smem>>
    return
  }
}

</mosaic_0001>

<llo_original>
// kernel: transductive_link_prediction_loss.1
$region0: #{transductive_link_prediction_loss.1}
  #allocation0 [shape = 'u32[]', space=smem, size = 0x4, offset = 0x4, fixed_abs, tag = 'smem constant byte address 0x4 - core index']
  #allocation1 [shape = 'u32[144,128]{1,0:T(1,128)}', space=vmem, size = 0x12000, scoped, tag = 'internal scratch']
  %s0 = inlined_call_operand.vmem [shape: s32[176,1], index: 0, kind: input, shape index: {}]
  %s1 = inlined_call_operand.vmem [shape: f32[51,32], index: 1, kind: input, shape index: {}]
  %s2 = inlined_call_operand.hbm [shape: f32[1,1], index: 2, kind: output, shape index: {}]
  %s3 = sld [smem:[#allocation0]]
  $region18: #{transductive_link_prediction_loss.1} parent=0
    _
  %s5 = ssub.s32 1, %s3
  %s6 = scalar_select 0, %s5, %s3
  $region1: #{transductive_link_prediction_loss.1} parent=0
    #allocation2 [shape = 'u8[512]{0}', space=smem, size = 0x200, scoped, tag = 'output window, operand 0, single buffered']
    #allocation3 [shape = 's32[1]{0}', space=sflag, size = 0x4, scoped, tag = 'scoped memory for transductive_link_prediction_loss.1']
    %7 = vsyncpa [#allocation3], 0
    // Predicated region
    $region2: #{transductive_link_prediction_loss.1} parent=1 // pred_check
      _
    $region3: #{transductive_link_prediction_loss.1} parent=1 // pred_check_branch
      %9 = sbr.rel (0) target = $region5
    $region4: #{transductive_link_prediction_loss.1} parent=1 // pred_region
      _
    $region5: #{transductive_link_prediction_loss.1} parent=1 // pred_fallthru
      _
    // Predicated region
    $region6: #{transductive_link_prediction_loss.1} parent=1 // pred_check
      _
    $region7: #{transductive_link_prediction_loss.1} parent=1 // pred_check_branch
      %11 = sbr.rel (0) target = $region9
    $region8: #{transductive_link_prediction_loss.1} parent=1 // pred_region
      _
    $region9: #{transductive_link_prediction_loss.1} parent=1 // pred_fallthru
      _
    %v13 = vld [vmem:[%s0] sm:$0xff]
    %v14 = vld [vmem:[%s0 + $0x8] sm:$0xff]
    %v15 = vld [vmem:[%s0 + $0x10] sm:$0xff]
    %v16 = vld [vmem:[%s0 + $0x18] sm:$0xff]
    %v17 = vlaneseq
    %v18 = vand.u32 %v17, 127
    %19 = vset.pattern.permute.xlu0 0
    %20 = vperm.xlu0 %19, %v13
    %v21 = vpop.permute.xlu0 %20
    %22 = vset.pattern.permute.xlu0 0
    %23 = vperm.xlu0 %22, %v14
    %v24 = vpop.permute.xlu0 %23
    %25 = vset.pattern.permute.xlu0 0
    %26 = vperm.xlu0 %25, %v15
    %v27 = vpop.permute.xlu0 %26
    %28 = vset.pattern.permute.xlu0 0
    %29 = vperm.xlu0 %28, %v16
    %v30 = vpop.permute.xlu0 %29
    %vm31 = vcmp.eq.s32.totalorder %v18, %v21
    %vm32 = vcmp.eq.s32.totalorder %v18, %v24
    %vm33 = vcmp.eq.s32.totalorder %v18, %v27
    %vm34 = vcmp.eq.s32.totalorder %v18, %v30
    %v35 = vsel %vm31, 1.0, 0.0
    %v36 = vsel %vm32, 1.0, 0.0
    %v37 = vsel %vm33, 1.0, 0.0
    %v38 = vsel %vm34, 1.0, 0.0
    %v39 = vpack.c.bf16 %v36, %v35
    %v40 = vpack.c.bf16 %v38, %v37
    %v41 = vld [vmem:[%s1] sm:$0xff]
    %v42 = vld [vmem:[%s1 + $0x8] sm:$0xff]
    %v43 = vld [vmem:[%s1 + $0x10] sm:$0xff]
    %v44 = vld [vmem:[%s1 + $0x18] sm:$0xff]
    %v45 = vld [vmem:[%s1 + $0x20] sm:$0xff]
    %v46 = vld [vmem:[%s1 + $0x28] sm:$0xff]
    %v47 = vld [vmem:[%s1 + $0x30] sm:$0x7]
    %v48 = vpack.c.bf16 %v42, %v41
    %v49 = vpack.c.bf16 %v44, %v43
    %v50 = vpack.c.bf16 %v46, %v45
    %v51 = vpack.c.bf16 %v47, %v47
    %vm52 = vcmask 416768
    %v54 = vsel %vm52, %v39, 0
    %v57 = vsel %vm52, %v40, 0
    %vm59 = vcmask 1040384
    %vm60 = vcmask 1041408
    %v61 = vsel %vm59, 4294967295, 65535
    %v62 = vsel %vm60, %v61, 0
    %v64 = vand.u32 %v51, %v62
    %66 = vmatprep.subr.bf16.mxu0 0
    %67 = vmatpush1.bf16.msra.mxu0 0
    %68 = vmatprep.subr.bf16.mxu0 0
    %69 = vmatpush1.bf16.msra.mxu0 0
    %70 = vmatprep.subr.bf16.mxu0 0
    %71 = vmatpush1.bf16.msra.mxu0 0
    %72 = vmatprep.subr.bf16.mxu0 0
    %73 = vmatpush1.bf16.msra.mxu0 0
    %74 = vmatprep.subr.bf16.mxu0 0
    %75 = vmatpush1.bf16.msra.mxu0 %v64
    %76 = vmatprep.subr.bf16.mxu0 0
    %77 = vmatpush1.bf16.msra.mxu0 %v50
    %78 = vmatprep.subr.bf16.mxu0 0
    %79 = vmatpush1.bf16.msra.mxu0 %v49
    %80 = vmatprep.subr.bf16.mxu0 0
    %81 = vmatpush1.bf16.msra.mxu0 %v48
    %82 = vmatprep.subr.bf16.mxu0 0
    %83 = vmatpush2.bf16.msra.mxu0 0
    %84 = vmatprep.subr.bf16.mxu0 0
    %85 = vmatpush2.bf16.msra.mxu0 0
    %86 = vmatprep.subr.bf16.mxu0 0
    %87 = vmatpush2.bf16.msra.mxu0 0
    %88 = vmatprep.subr.bf16.mxu0 0
    %89 = vmatpush2.bf16.msra.mxu0 0
    %90 = vmatprep.subr.bf16.mxu0 0
    %91 = vmatpush2.bf16.msra.mxu0 0
    %92 = vmatprep.subr.bf16.mxu0 0
    %93 = vmatpush2.bf16.msra.mxu0 0
    %94 = vmatprep.subr.bf16.mxu0 0
    %95 = vmatpush2.bf16.msra.mxu0 0
    %96 = vmatprep.subr.bf16.mxu0 0
    %97 = vmatpush2.bf16.msra.mxu0 0
    %98 = vmatprep.mubr.bf16.mxu0 0
    %99 = vmatmul.mubr.bf16.gmra.mxu0 %v54
    %v100 = vpop.f32.mrf.mxu0
    %v101 = vadd.f32 0.0, %v100
    %v102 = vpop.f32.mrf.mxu0
    %v103 = vpop.f32.mrf.mxu0
    %v104 = vadd.f32 0.0, %v103
    %v105 = vpop.f32.mrf.mxu0
    %106 = vmatprep.mubr.bf16.mxu0 0
    %107 = vmatmul.mubr.bf16.gmra.mxu0 %v57
    %v108 = vpop.f32.mrf.mxu0
    %v109 = vadd.f32 0.0, %v108
    %v110 = vpop.f32.mrf.mxu0
    %v111 = vpop.f32.mrf.mxu0
    %v112 = vadd.f32 0.0, %v111
    %v113 = vpop.f32.mrf.mxu0
    %114 = vdwg.mxu0
    %v115 = vmul.f32 %v101, %v101
    %v116 = vmul.f32 %v104, %v104
    %v117 = vmul.f32 %v109, %v109
    %v118 = vmul.f32 %v112, %v112
    %vm119 = vcmask 261120
    %v120 = vsel %vm119, %v115, 0.0
    %121 = vadd.xlane.f32.xlu0 %v120
    %v122 = vpop.xlane.xlu0 %121
    %v123 = vsel %vm119, %v116, 0.0
    %124 = vadd.xlane.f32.xlu0 %v123
    %v125 = vpop.xlane.xlu0 %124
    %v126 = vsel %vm119, %v117, 0.0
    %127 = vadd.xlane.f32.xlu0 %v126
    %v128 = vpop.xlane.xlu0 %127
    %v129 = vsel %vm119, %v118, 0.0
    %130 = vadd.xlane.f32.xlu0 %v129
    %v131 = vpop.xlane.xlu0 %130
    %v132 = vlaneseq
    %v133 = vshrl.u32 %v132, 7
    %v134 = vadd.s32 %v133, 8
    %v135 = vadd.s32 %v133, 16
    %v136 = vadd.s32 %v133, 24
    %vm137 = vcmp.lt.s32.totalorder %v133, 16
    %vm138 = vcmp.lt.s32.totalorder %v134, 16
    %vm139 = vcmp.lt.s32.totalorder %v135, 16
    %vm140 = vcmp.lt.s32.totalorder %v136, 16
    %v141 = vmax.f32 %v122, 1e-24
    %v142 = vmax.f32 %v125, 1e-24
    %v143 = vmax.f32 %v128, 1e-24
    %v144 = vmax.f32 %v131, 1e-24
    %v145 = vrsqrt.pop %v141
    %v146 = vrsqrt.pop %v142
    %v147 = vrsqrt.pop %v143
    %v148 = vrsqrt.pop %v144
    %v149 = vsel %vm137, %v145, 1.0
    %v150 = vsel %vm138, %v146, 1.0
    %v151 = vsel %vm139, %v147, 1.0
    %v152 = vsel %vm140, %v148, 1.0
    %v153 = vmul.f32 %v101, %v149
    %v154 = vmul.f32 %v104, %v150
    %v155 = vmul.f32 %v109, %v151
    %v156 = vmul.f32 %v112, %v152
    %v157 = vld [vmem:[%s0 + $0x20] sm:$0xff]
    %v158 = vld [vmem:[%s0 + $0x28] sm:$0xff]
    %v159 = vld [vmem:[%s0 + $0x30] sm:$0xff]
    %v160 = vld [vmem:[%s0 + $0x38] sm:$0xff]
    %v161 = vld [vmem:[%s0 + $0x40] sm:$0xff]
    %v162 = vld [vmem:[%s0 + $0x48] sm:$0xff]
    %v163 = vld [vmem:[%s0 + $0x50] sm:$0xff]
    %v164 = vld [vmem:[%s0 + $0x58] sm:$0xff]
    %v165 = vld [vmem:[%s0 + $0x60] sm:$0xff]
    %v166 = vld [vmem:[%s0 + $0x68] sm:$0xff]
    %v167 = vld [vmem:[%s0 + $0x70] sm:$0xff]
    %v168 = vld [vmem:[%s0 + $0x78] sm:$0xff]
    %v169 = vld [vmem:[%s0 + $0x80] sm:$0xff]
    %v170 = vld [vmem:[%s0 + $0x88] sm:$0xff]
    %v171 = vld [vmem:[%s0 + $0x90] sm:$0xff]
    %v172 = vld [vmem:[%s0 + $0x98] sm:$0xff]
    %v173 = vld [vmem:[%s0 + $0xa0] sm:$0xff]
    %v174 = vld [vmem:[%s0 + $0xa8] sm:$0xff]
    %175 = vset.pattern.permute.xlu0 0
    %176 = vperm.xlu0 %175, %v157
    %v177 = vpop.permute.xlu0 %176
    %178 = vset.pattern.permute.xlu0 0
    %179 = vperm.xlu0 %178, %v158
    %v180 = vpop.permute.xlu0 %179
    %181 = vset.pattern.permute.xlu0 0
    %182 = vperm.xlu0 %181, %v159
    %v183 = vpop.permute.xlu0 %182
    %184 = vset.pattern.permute.xlu0 0
    %185 = vperm.xlu0 %184, %v160
    %v186 = vpop.permute.xlu0 %185
    %187 = vset.pattern.permute.xlu0 0
    %188 = vperm.xlu0 %187, %v161
    %v189 = vpop.permute.xlu0 %188
    %190 = vset.pattern.permute.xlu0 0
    %191 = vperm.xlu0 %190, %v162
    %v192 = vpop.permute.xlu0 %191
    %vm193 = vcmp.eq.s32.totalorder %v18, %v177
    %vm194 = vcmp.eq.s32.totalorder %v18, %v180
    %vm195 = vcmp.eq.s32.totalorder %v18, %v183
    %vm196 = vcmp.eq.s32.totalorder %v18, %v186
    %vm197 = vcmp.eq.s32.totalorder %v18, %v189
    %vm198 = vcmp.eq.s32.totalorder %v18, %v192
    %v199 = vsel %vm193, 1.0, 0.0
    %v200 = vsel %vm194, 1.0, 0.0
    %v201 = vsel %vm195, 1.0, 0.0
    %v202 = vsel %vm196, 1.0, 0.0
    %v203 = vsel %vm197, 1.0, 0.0
    %v204 = vsel %vm198, 1.0, 0.0
    %205 = vset.pattern.permute.xlu0 0
    %206 = vperm.xlu0 %205, %v163
    %v207 = vpop.permute.xlu0 %206
    %208 = vset.pattern.permute.xlu0 0
    %209 = vperm.xlu0 %208, %v164
    %v210 = vpop.permute.xlu0 %209
    %211 = vset.pattern.permute.xlu0 0
    %212 = vperm.xlu0 %211, %v165
    %v213 = vpop.permute.xlu0 %212
    %214 = vset.pattern.permute.xlu0 0
    %215 = vperm.xlu0 %214, %v166
    %v216 = vpop.permute.xlu0 %215
    %217 = vset.pattern.permute.xlu0 0
    %218 = vperm.xlu0 %217, %v167
    %v219 = vpop.permute.xlu0 %218
    %220 = vset.pattern.permute.xlu0 0
    %221 = vperm.xlu0 %220, %v168
    %v222 = vpop.permute.xlu0 %221
    %vm223 = vcmp.eq.s32.totalorder %v18, %v207
    %vm224 = vcmp.eq.s32.totalorder %v18, %v210
    %vm225 = vcmp.eq.s32.totalorder %v18, %v213
    %vm226 = vcmp.eq.s32.totalorder %v18, %v216
    %vm227 = vcmp.eq.s32.totalorder %v18, %v219
    %vm228 = vcmp.eq.s32.totalorder %v18, %v222
    %v229 = vsel %vm223, 1.0, 0.0
    %v230 = vsel %vm224, 1.0, 0.0
    %v231 = vsel %vm225, 1.0, 0.0
    %v232 = vsel %vm226, 1.0, 0.0
    %v233 = vsel %vm227, 1.0, 0.0
    %v234 = vsel %vm228, 1.0, 0.0
    %v235 = vsub.f32 %v199, %v229
    %v236 = vsub.f32 %v200, %v230
    %v237 = vsub.f32 %v201, %v231
    %v238 = vsub.f32 %v202, %v232
    %v239 = vsub.f32 %v203, %v233
    %v240 = vsub.f32 %v204, %v234
    %241 = vset.pattern.permute.xlu0 0
    %242 = vperm.xlu0 %241, %v169
    %v243 = vpop.permute.xlu0 %242
    %244 = vset.pattern.permute.xlu0 0
    %245 = vperm.xlu0 %244, %v170
    %v246 = vpop.permute.xlu0 %245
    %247 = vset.pattern.permute.xlu0 0
    %248 = vperm.xlu0 %247, %v171
    %v249 = vpop.permute.xlu0 %248
    %250 = vset.pattern.permute.xlu0 0
    %251 = vperm.xlu0 %250, %v172
    %v252 = vpop.permute.xlu0 %251
    %253 = vset.pattern.permute.xlu0 0
    %254 = vperm.xlu0 %253, %v173
    %v255 = vpop.permute.xlu0 %254
    %256 = vset.pattern.permute.xlu0 0
    %257 = vperm.xlu0 %256, %v174
    %v258 = vpop.permute.xlu0 %257
    %vm259 = vcmp.eq.s32.totalorder %v18, %v243
    %vm260 = vcmp.eq.s32.totalorder %v18, %v246
    %vm261 = vcmp.eq.s32.totalorder %v18, %v249
    %vm262 = vcmp.eq.s32.totalorder %v18, %v252
    %vm263 = vcmp.eq.s32.totalorder %v18, %v255
    %vm264 = vcmp.eq.s32.totalorder %v18, %v258
    %v265 = vsel %vm259, 1.0, 0.0
    %v266 = vsel %vm260, 1.0, 0.0
    %v267 = vsel %vm261, 1.0, 0.0
    %v268 = vsel %vm262, 1.0, 0.0
    %v269 = vsel %vm263, 1.0, 0.0
    %v270 = vsel %vm264, 1.0, 0.0
    %v271 = vadd.f32 %v235, %v265
    %v272 = vadd.f32 %v236, %v266
    %v273 = vadd.f32 %v237, %v267
    %v274 = vadd.f32 %v238, %v268
    %v275 = vadd.f32 %v239, %v269
    %v276 = vadd.f32 %v240, %v270
    %v277 = vpack.c.bf16 %v272, %v271
    %v278 = vpack.c.bf16 %v274, %v273
    %v279 = vpack.c.bf16 %v276, %v275
    %v280 = vpack.c.bf16 %v154, %v153
    %v281 = vpack.c.bf16 %v156, %v155
    %v283 = vsel %vm119, %v277, 0
    %v286 = vsel %vm119, %v278, 0
    %v289 = vsel %vm119, %v279, 0
    %291 = vmatprep.subr.bf16.mxu0 0
    %292 = vmatpush1.bf16.msra.mxu0 0
    %293 = vmatprep.subr.bf16.mxu0 0
    %294 = vmatpush1.bf16.msra.mxu0 0
    %295 = vmatprep.subr.bf16.mxu0 0
    %296 = vmatpush1.bf16.msra.mxu0 0
    %297 = vmatprep.subr.bf16.mxu0 0
    %298 = vmatpush1.bf16.msra.mxu0 0
    %299 = vmatprep.subr.bf16.mxu0 0
    %300 = vmatpush1.bf16.msra.mxu0 0
    %301 = vmatprep.subr.bf16.mxu0 0
    %302 = vmatpush1.bf16.msra.mxu0 0
    %303 = vmatprep.subr.bf16.mxu0 0
    %304 = vmatpush1.bf16.msra.mxu0 %v281
    %305 = vmatprep.subr.bf16.mxu0 0
    %306 = vmatpush1.bf16.msra.mxu0 %v280
    %307 = vmatprep.subr.bf16.mxu0 0
    %308 = vmatpush2.bf16.msra.mxu0 0
    %309 = vmatprep.subr.bf16.mxu0 0
    %310 = vmatpush2.bf16.msra.mxu0 0
    %311 = vmatprep.subr.bf16.mxu0 0
    %312 = vmatpush2.bf16.msra.mxu0 0
    %313 = vmatprep.subr.bf16.mxu0 0
    %314 = vmatpush2.bf16.msra.mxu0 0
    %315 = vmatprep.subr.bf16.mxu0 0
    %316 = vmatpush2.bf16.msra.mxu0 0
    %317 = vmatprep.subr.bf16.mxu0 0
    %318 = vmatpush2.bf16.msra.mxu0 0
    %319 = vmatprep.subr.bf16.mxu0 0
    %320 = vmatpush2.bf16.msra.mxu0 0
    %321 = vmatprep.subr.bf16.mxu0 0
    %322 = vmatpush2.bf16.msra.mxu0 0
    %323 = vmatprep.mubr.bf16.mxu0 0
    %324 = vmatmul.mubr.bf16.gmra.mxu0 %v283
    %v325 = vpop.f32.mrf.mxu0
    %v326 = vadd.f32 0.0, %v325
    %v327 = vpop.f32.mrf.mxu0
    %v328 = vpop.f32.mrf.mxu0
    %v329 = vadd.f32 0.0, %v328
    %v330 = vpop.f32.mrf.mxu0
    %331 = vmatprep.mubr.bf16.mxu0 0
    %332 = vmatmul.mubr.bf16.gmra.mxu0 %v286
    %v333 = vpop.f32.mrf.mxu0
    %v334 = vadd.f32 0.0, %v333
    %v335 = vpop.f32.mrf.mxu0
    %v336 = vpop.f32.mrf.mxu0
    %v337 = vadd.f32 0.0, %v336
    %v338 = vpop.f32.mrf.mxu0
    %339 = vmatprep.mubr.bf16.mxu0 0
    %340 = vmatmul.mubr.bf16.gmra.mxu0 %v289
    %v341 = vpop.f32.mrf.mxu0
    %v342 = vadd.f32 0.0, %v341
    %v343 = vpop.f32.mrf.mxu0
    %v344 = vpop.f32.mrf.mxu0
    %v345 = vadd.f32 0.0, %v344
    %v346 = vpop.f32.mrf.mxu0
    %347 = vdwg.mxu0
    %v348 = vand.u32 2147483647, %v326
    %v349 = vand.u32 2147483647, %v329
    %v350 = vand.u32 2147483647, %v334
    %v351 = vand.u32 2147483647, %v337
    %v352 = vand.u32 2147483647, %v342
    %v353 = vsel %vm119, %v348, 0.0
    %354 = vadd.xlane.f32.xlu0 %v353
    %v355 = vpop.xlane.xlu0 %354
    %v356 = vsel %vm119, %v349, 0.0
    %357 = vadd.xlane.f32.xlu0 %v356
    %v358 = vpop.xlane.xlu0 %357
    %v359 = vsel %vm119, %v350, 0.0
    %360 = vadd.xlane.f32.xlu0 %v359
    %v361 = vpop.xlane.xlu0 %360
    %v362 = vsel %vm119, %v351, 0.0
    %363 = vadd.xlane.f32.xlu0 %v362
    %v364 = vpop.xlane.xlu0 %363
    %v365 = vsel %vm119, %v352, 0.0
    %366 = vadd.xlane.f32.xlu0 %v365
    %v367 = vpop.xlane.xlu0 %366
    %v368 = vadd.f32 %v355, 1.0
    %v369 = vsub.f32 %v368, %v358
    %v370 = vmax.f32 %v369, 0.0
    %v371 = vadd.f32 %v370, 0.0
    %v372 = vsub.f32 %v368, %v361
    %v373 = vmax.f32 %v372, 0.0
    %v374 = vadd.f32 %v371, %v373
    %v375 = vsub.f32 %v368, %v364
    %v376 = vmax.f32 %v375, 0.0
    %v377 = vadd.f32 %v374, %v376
    %v378 = vsub.f32 %v368, %v367
    %v379 = vmax.f32 %v378, 0.0
    %v380 = vadd.f32 %v377, %v379
    %vm381 = vcmask 7168
    %v382 = vsel %vm381, %v380, 0.0
    %383 = vadd.xlane.f32.xlu0 %v382
    %v384 = vpop.xlane.xlu0 %383
    %v385 = vrot.slane %v384, 4
    %v386 = vadd.f32 %v384, %v385
    %v387 = vrot.slane %v386, 2
    %v388 = vadd.f32 %v386, %v387
    %v389 = vrot.slane %v388, 1
    %v390 = vadd.f32 %v388, %v389
    %s391 = vtos %v390
    %s392 = smul.f32 %s391, 0.03125
    %v393 = vmul.f32 %v153, %v153
    %v394 = vmul.f32 %v154, %v154
    %v395 = vsel %vm119, %v393, 0.0
    %v396 = vsel %vm119, %v394, 0.0
    %v397 = vadd.f32 %v395, %v396
    %398 = vadd.xlane.f32.xlu0 %v397
    %v399 = vpop.xlane.xlu0 %398
    %v400 = vrot.slane %v399, 4
    %v401 = vadd.f32 %v399, %v400
    %v402 = vrot.slane %v401, 2
    %v403 = vadd.f32 %v401, %v402
    %v404 = vrot.slane %v403, 1
    %v405 = vadd.f32 %v403, %v404
    %s406 = vtos %v405
    %v407 = vmul.f32 %v345, %v345
    %v408 = vsel %vm119, %v407, 0.0
    %409 = vadd.xlane.f32.xlu0 %v408
    %v410 = vpop.xlane.xlu0 %409
    %v411 = vrot.slane %v410, 4
    %v412 = vadd.f32 %v410, %v411
    %v413 = vrot.slane %v412, 2
    %v414 = vadd.f32 %v412, %v413
    %v415 = vrot.slane %v414, 1
    %v416 = vadd.f32 %v414, %v415
    %s417 = vtos %v416
    %s418 = sadd.f32 %s406, %s417
    %s419 = smul.f32 %s418, 1.3020834e-05
    %s420 = sadd.f32 %s392, %s419
    %s421 = scalar_lea.smem [#allocation2], 0
    %422 = sst [smem:[%s421]] %s420
    // Predicated region
    $region10: #{transductive_link_prediction_loss.1} parent=1 // pred_check
      _
    $region11: #{transductive_link_prediction_loss.1} parent=1 // pred_check_branch
      %424 = sbr.rel (0) target = $region13
    $region12: #{transductive_link_prediction_loss.1} parent=1 // pred_region
      %s426 = ssub.s32 16, 16
      %427 = vsyncadd [#allocation3], %s426
      %430 = dma.smem_to_hbm [#allocation2], 16, %s2, [#allocation3]
    $region13: #{transductive_link_prediction_loss.1} parent=1 // pred_fallthru
      _
    // Predicated region
    $region14: #{transductive_link_prediction_loss.1} parent=1 // pred_check
      _
    $region15: #{transductive_link_prediction_loss.1} parent=1 // pred_check_branch
      %432 = sbr.rel (0) target = $region17
    $region16: #{transductive_link_prediction_loss.1} parent=1 // pred_region
      %433 = dma.done [#allocation3], 16
    $region17: #{transductive_link_prediction_loss.1} parent=1 // pred_fallthru
      _
    %434 = sfence
    %435 = vsyncpa [#allocation3], 1

</llo_original>
